<compile_context>
chip_gen: v7x
topology: tpu7x:2x2x1
jax: 0.10.0
libtpu: 0.0.40
codegen_flags: <defaults>
</compile_context>

<pallas_src>
import functools

import jax
import jax.numpy as jnp
from jax import lax
from jax.experimental import pallas as pl
from jax.experimental.pallas import tpu as pltpu


def _gelu_exact(x):
    # PyTorch nn.GELU() default: exact erf-based GELU.
    return 0.5 * x * (1.0 + lax.erf(x * 0.7071067811865476))


def _round_up(n, m):
    return ((n + m - 1) // m) * m


def mlp_block_kernel(x_ref, gamma_ref, beta_ref, w1_ref, b1_ref, w2_ref, b2_ref,
                     o_ref, xn_ref, acc_ref, *, eps):
    # Grid: (token tiles i, hidden-dim tiles k).  x/o tiles are (tm, E);
    # w1_ref is the (E, tk) slice, w2_ref the (tk, E) slice, b1_ref (1, tk).
    k = pl.program_id(1)

    @pl.when(k == 0)
    def _():
        # ---- LayerNorm over last dim (biased variance, eps like nn.LayerNorm) ----
        # Computed once per token tile and cached; accumulator zeroed.
        x = x_ref[...].astype(jnp.float32)
        mean = jnp.mean(x, axis=-1, keepdims=True)
        xc = x - mean
        var = jnp.mean(xc * xc, axis=-1, keepdims=True)
        inv = lax.rsqrt(var + eps)
        xn = (xc * inv * gamma_ref[...].astype(jnp.float32)
              + beta_ref[...].astype(jnp.float32))
        xn_ref[...] = xn.astype(xn_ref.dtype)       # stored in MXU operand dtype
        acc_ref[...] = jnp.zeros_like(acc_ref)

    # ---- Linear(E -> tk slice of M) + GELU ----
    # Native-dtype MXU operands, f32 accumulation via preferred_element_type.
    h = jnp.dot(xn_ref[...], w1_ref[...], preferred_element_type=jnp.float32)
    h = _gelu_exact(h + b1_ref[...].astype(jnp.float32))
    # (Dropout: identity at inference.)

    # ---- Linear(tk slice of M -> E): accumulate this slice's contribution ----
    acc_ref[...] += jnp.dot(h.astype(w2_ref.dtype), w2_ref[...],
                            preferred_element_type=jnp.float32)

    @pl.when(k == pl.num_programs(1) - 1)
    def _():
        y = _gelu_exact(acc_ref[...] + b2_ref[...].astype(jnp.float32))
        # (Dropout: identity at inference.)
        o_ref[...] = y.astype(o_ref.dtype)


def mlp_block_forward(x, gamma, beta, w1, b1, w2, b2, *, eps=1e-5, tm=None, tk=None):
    """x: (B, S, E). Weights stored already transposed: w1 (E, M), w2 (M, E)."""
    B, S, E = x.shape
    M = w1.shape[1]
    N = B * S

    # ---- token-tile choice: big tiles amortize the ~0.35us/step overhead ----
    row_align = 8 if x.dtype == jnp.float32 else 16
    if tm is None:
        tm = 256 if x.dtype == jnp.float32 else 512
    tm_eff = min(tm, _round_up(N, row_align))
    tm_eff = _round_up(tm_eff, row_align)
    Np = _round_up(N, tm_eff)

    w_isz = w1.dtype.itemsize
    x_isz = x.dtype.itemsize

    def est_bytes(tk_):
        act = 2 * 2 * tm_eff * E * x_isz                    # x/out tiles, 2-deep
        wblk = 2 * (E * tk_ + tk_ * E + tk_) * w_isz        # W1/W2/b1 slices, 2-deep
        small = 2 * 3 * E * 4                               # gamma/beta/b2
        scratch = tm_eff * E * (4 + w_isz)                  # acc (f32) + xn cache
        inter = 2 * 4 * tm_eff * tk_                        # f32 h temporaries
        return int(1.25 * (act + wblk + small + scratch + inter))

    # ---- hidden-dim tile: keep weights fully resident when they fit VMEM,
    #      otherwise stream M in 128-aligned slices that divide M exactly. ----
    try:
        vmem_cap = int(pltpu.get_tpu_info().vmem_capacity_bytes)
    except Exception:
        vmem_cap = 64 * 1024 * 1024                         # conservative (v7x)
    budget = min(int(0.85 * vmem_cap), 100 * 1024 * 1024)

    if tk is None:
        candidates = [M] + [c for c in (2048, 1024, 512, 256, 128)
                            if c < M and M % c == 0]
        tk = candidates[-1]
        for c in candidates:
            if est_bytes(c) <= budget:
                tk = c
                break
    else:
        if M % tk != 0 or (tk != M and tk % 128 != 0):
            tk = M                                           # invalid override -> resident

    vmem_limit = int(min(max(est_bytes(tk), 32 * 1024 * 1024), 100 * 1024 * 1024))

    x2 = x.reshape(N, E)
    if Np != N:
        # Zero-pad the token axis; padded rows are computed and then dropped.
        x2 = jnp.pad(x2, ((0, Np - N), (0, 0)))

    grid = (Np // tm_eff, M // tk)

    out2 = pl.pallas_call(
        functools.partial(mlp_block_kernel, eps=eps),
        out_shape=jax.ShapeDtypeStruct((Np, E), x.dtype),
        grid_spec=pltpu.PrefetchScalarGridSpec(
            num_scalar_prefetch=0,
            grid=grid,
            in_specs=[
                pl.BlockSpec((tm_eff, E), lambda i, k: (i, 0)),   # x tile
                pl.BlockSpec((1, E), lambda i, k: (0, 0)),        # gamma
                pl.BlockSpec((1, E), lambda i, k: (0, 0)),        # beta
                pl.BlockSpec((E, tk), lambda i, k: (0, k)),       # W1 (E, tk) slice
                pl.BlockSpec((1, tk), lambda i, k: (0, k)),       # b1 slice
                pl.BlockSpec((tk, E), lambda i, k: (k, 0)),       # W2 (tk, E) slice
                pl.BlockSpec((1, E), lambda i, k: (0, 0)),        # b2
            ],
            out_specs=pl.BlockSpec((tm_eff, E), lambda i, k: (i, 0)),
            scratch_shapes=[
                pltpu.VMEM((tm_eff, E), w1.dtype),      # cached LayerNorm output
                pltpu.VMEM((tm_eff, E), jnp.float32),   # f32 output accumulator
            ],
        ),
        compiler_params=pltpu.CompilerParams(
            dimension_semantics=("parallel", "arbitrary"),
            vmem_limit_bytes=vmem_limit),
    )(x2, gamma, beta, w1, b1, w2, b2)

    if Np != N:
        out2 = out2[:N]
    return out2.reshape(B, S, E)


def reference_forward(x, gamma, beta, w1, b1, w2, b2, eps=1e-5):
    xf = x.astype(jnp.float32)
    mean = jnp.mean(xf, axis=-1, keepdims=True)
    var = jnp.mean((xf - mean) ** 2, axis=-1, keepdims=True)
    xn = (xf - mean) * lax.rsqrt(var + eps) * gamma[0].astype(jnp.float32) \
        + beta[0].astype(jnp.float32)
    h = _gelu_exact(xn @ w1.astype(jnp.float32) + b1[0].astype(jnp.float32))
    y = _gelu_exact(h @ w2.astype(jnp.float32) + b2[0].astype(jnp.float32))
    return y.astype(x.dtype)


if __name__ == "__main__":
    # Small shapes consistent with the module (embedding_dim, mlp_size scaled down).
    EMBED, MLP = 32, 64

    key = jax.random.PRNGKey(0)
    kx, kw1, kb1, kw2, kb2, kx2, kw1b, kb1b, kw2b, kb2b, kx3 = jax.random.split(key, 11)

    gamma = jnp.ones((1, EMBED), dtype=jnp.float32)
    beta = jnp.zeros((1, EMBED), dtype=jnp.float32)
    w1 = jax.random.normal(kw1, (EMBED, MLP), dtype=jnp.float32) * 0.02
    b1 = jax.random.normal(kb1, (1, MLP), dtype=jnp.float32) * 0.02
    w2 = jax.random.normal(kw2, (MLP, EMBED), dtype=jnp.float32) * 0.02
    b2 = jax.random.normal(kb2, (1, EMBED), dtype=jnp.float32) * 0.02

    # Case 1: N = B*S aligned to the row tile, single hidden-dim step (resident path).
    B, S = 2, 8
    x = jax.random.normal(kx, (B, S, EMBED), dtype=jnp.float32)
    out = jax.block_until_ready(mlp_block_forward(x, gamma, beta, w1, b1, w2, b2))
    ref = reference_forward(x, gamma, beta, w1, b1, w2, b2)
    assert out.shape == (B, S, EMBED)
    assert jnp.allclose(out, ref, atol=1e-5, rtol=1e-5), "mismatch vs reference (case 1)"

    # Case 2: N not a multiple of 8 — exercises the padding / tail path.
    B2, S2 = 2, 9
    x2 = jax.random.normal(kx2, (B2, S2, EMBED), dtype=jnp.float32)
    out2 = jax.block_until_ready(mlp_block_forward(x2, gamma, beta, w1, b1, w2, b2))
    ref2 = reference_forward(x2, gamma, beta, w1, b1, w2, b2)
    assert out2.shape == (B2, S2, EMBED)
    assert jnp.allclose(out2, ref2, atol=1e-5, rtol=1e-5), "mismatch vs reference (case 2)"

    # Case 3: forced hidden-dim tiling (tk < M) — exercises the accumulator path.
    MLP3 = 256
    w1b = jax.random.normal(kw1b, (EMBED, MLP3), dtype=jnp.float32) * 0.02
    b1b = jax.random.normal(kb1b, (1, MLP3), dtype=jnp.float32) * 0.02
    w2b = jax.random.normal(kw2b, (MLP3, EMBED), dtype=jnp.float32) * 0.02
    b2b = jax.random.normal(kb2b, (1, EMBED), dtype=jnp.float32) * 0.02
    x3 = jax.random.normal(kx3, (B, S, EMBED), dtype=jnp.float32)
    out3 = jax.block_until_ready(
        mlp_block_forward(x3, gamma, beta, w1b, b1b, w2b, b2b, tk=128))
    ref3 = reference_forward(x3, gamma, beta, w1b, b1b, w2b, b2b)
    assert out3.shape == (B, S, EMBED)
    assert jnp.allclose(out3, ref3, atol=1e-5, rtol=1e-5), "mismatch vs reference (case 3)"

    print("KERNEL_OK")
</pallas_src>

<mosaic_0001>
module attributes {stable_mosaic.version = 11 : i64} {
  func.func @mlp_block_kernel(%arg0: i32, %arg1: i32, %arg2: memref<16x32xf32, #tpu.memory_space<vmem>>, %arg3: memref<1x32xf32, #tpu.memory_space<vmem>>, %arg4: memref<1x32xf32, #tpu.memory_space<vmem>>, %arg5: memref<32x64xf32, #tpu.memory_space<vmem>>, %arg6: memref<1x64xf32, #tpu.memory_space<vmem>>, %arg7: memref<64x32xf32, #tpu.memory_space<vmem>>, %arg8: memref<1x32xf32, #tpu.memory_space<vmem>>, %arg9: memref<16x32xf32, #tpu.memory_space<vmem>>, %arg10: memref<16x32xf32, #tpu.memory_space<vmem>>, %arg11: memref<16x32xf32, #tpu.memory_space<vmem>>) attributes {dimension_semantics = [#tpu.dimension_semantics<parallel>, #tpu.dimension_semantics<arbitrary>], iteration_bounds = array<i64: 1, 1>, scalar_prefetch = 0 : i64, scratch_operands = 2 : i64, tpu.core_type = #tpu.core_type<tc>, window_params = [{transform_indices = @transform_0, window_bounds = array<i64: 16, 32>}, {pipeline_mode = #tpu.pipeline_mode<synchronous>, transform_indices = @transform_1, window_bounds = array<i64: 1, 32>}, {pipeline_mode = #tpu.pipeline_mode<synchronous>, transform_indices = @transform_2, window_bounds = array<i64: 1, 32>}, {transform_indices = @transform_3, window_bounds = array<i64: 32, 64>}, {transform_indices = @transform_4, window_bounds = array<i64: 1, 64>}, {transform_indices = @transform_5, window_bounds = array<i64: 64, 32>}, {pipeline_mode = #tpu.pipeline_mode<synchronous>, transform_indices = @transform_6, window_bounds = array<i64: 1, 32>}, {transform_indices = @transform_7, window_bounds = array<i64: 16, 32>}]} {
    %c0_i32 = arith.constant 0 : i32
    %0 = arith.cmpi eq, %arg1, %c0_i32 : i32
    %1 = arith.extui %0 : i1 to i32
    %c0_i32_0 = arith.constant 0 : i32
    %2 = arith.cmpi ne, %1, %c0_i32_0 : i32
    scf.if %2 {
      %c0_18 = arith.constant 0 : index
      %c0_19 = arith.constant 0 : index
      %25 = vector.load %arg2[%c0_18, %c0_19] : memref<16x32xf32, #tpu.memory_space<vmem>>, vector<16x32xf32>
      %cst_20 = arith.constant dense<0.000000e+00> : vector<16xf32>
      %26 = vector.multi_reduction <add>, %25, %cst_20 [1] : vector<16x32xf32> to vector<16xf32>
      %27 = vector.shape_cast %26 : vector<16xf32> to vector<16x1xf32>
      %cst_21 = arith.constant 3.200000e+01 : f32
      %28 = vector.broadcast %cst_21 : f32 to vector<16x1xf32>
      %29 = arith.divf %27, %28 : vector<16x1xf32>
      %30 = vector.broadcast %29 : vector<16x1xf32> to vector<16x32xf32>
      %31 = arith.subf %25, %30 : vector<16x32xf32>
      %32 = arith.mulf %31, %31 : vector<16x32xf32>
      %cst_22 = arith.constant dense<0.000000e+00> : vector<16xf32>
      %33 = vector.multi_reduction <add>, %32, %cst_22 [1] : vector<16x32xf32> to vector<16xf32>
      %34 = vector.shape_cast %33 : vector<16xf32> to vector<16x1xf32>
      %cst_23 = arith.constant 3.200000e+01 : f32
      %35 = vector.broadcast %cst_23 : f32 to vector<16x1xf32>
      %36 = arith.divf %34, %35 : vector<16x1xf32>
      %cst_24 = arith.constant 9.99999974E-6 : f32
      %37 = vector.broadcast %cst_24 : f32 to vector<16x1xf32>
      %38 = arith.addf %36, %37 : vector<16x1xf32>
      %39 = math.rsqrt %38 : vector<16x1xf32>
      %40 = vector.broadcast %39 : vector<16x1xf32> to vector<16x32xf32>
      %41 = arith.mulf %31, %40 : vector<16x32xf32>
      %c0_25 = arith.constant 0 : index
      %c0_26 = arith.constant 0 : index
      %42 = vector.load %arg3[%c0_25, %c0_26] : memref<1x32xf32, #tpu.memory_space<vmem>>, vector<1x32xf32>
      %43 = vector.broadcast %42 : vector<1x32xf32> to vector<16x32xf32>
      %44 = arith.mulf %41, %43 : vector<16x32xf32>
      %c0_27 = arith.constant 0 : index
      %c0_28 = arith.constant 0 : index
      %45 = vector.load %arg4[%c0_27, %c0_28] : memref<1x32xf32, #tpu.memory_space<vmem>>, vector<1x32xf32>
      %46 = vector.broadcast %45 : vector<1x32xf32> to vector<16x32xf32>
      %47 = arith.addf %44, %46 : vector<16x32xf32>
      %c0_29 = arith.constant 0 : index
      %c0_30 = arith.constant 0 : index
      %48 = vector.load %arg10[%c0_29, %c0_30] : memref<16x32xf32, #tpu.memory_space<vmem>>, vector<16x32xf32>
      tpu.vector_store %arg10[%c0_29, %c0_30], %47 {strides = array<i32>} : memref<16x32xf32, #tpu.memory_space<vmem>>, vector<16x32xf32>,
      %cst_31 = arith.constant 0.000000e+00 : f32
      %49 = vector.broadcast %cst_31 : f32 to vector<16x32xf32>
      %c0_32 = arith.constant 0 : index
      %c0_33 = arith.constant 0 : index
      %50 = vector.load %arg11[%c0_32, %c0_33] : memref<16x32xf32, #tpu.memory_space<vmem>>, vector<16x32xf32>
      tpu.vector_store %arg11[%c0_32, %c0_33], %49 {strides = array<i32>} : memref<16x32xf32, #tpu.memory_space<vmem>>, vector<16x32xf32>,
    } else {
    }
    %c0 = arith.constant 0 : index
    %c0_1 = arith.constant 0 : index
    %3 = vector.load %arg10[%c0, %c0_1] : memref<16x32xf32, #tpu.memory_space<vmem>>, vector<16x32xf32>
    %c0_2 = arith.constant 0 : index
    %c0_3 = arith.constant 0 : index
    %4 = vector.load %arg5[%c0_2, %c0_3] : memref<32x64xf32, #tpu.memory_space<vmem>>, vector<32x64xf32>
    %cst = arith.constant dense<0.000000e+00> : vector<16x64xf32>
    %5 = tpu.matmul %3, %4, %cst {dimension_numbers = #tpu.dot_dimension_numbers<[1], [0], [0], [1], [0, 0, 1, 1], [], []>} : vector<16x32xf32>, vector<32x64xf32>, vector<16x64xf32> -> vector<16x64xf32>
    %c0_4 = arith.constant 0 : index
    %c0_5 = arith.constant 0 : index
    %6 = vector.load %arg6[%c0_4, %c0_5] : memref<1x64xf32, #tpu.memory_space<vmem>>, vector<1x64xf32>
    %7 = vector.broadcast %6 : vector<1x64xf32> to vector<16x64xf32>
    %8 = arith.addf %5, %7 : vector<16x64xf32>
    %cst_6 = arith.constant 5.000000e-01 : f32
    %9 = vector.broadcast %cst_6 : f32 to vector<16x64xf32>
    %10 = arith.mulf %9, %8 : vector<16x64xf32>
    %cst_7 = arith.constant 0.707106769 : f32
    %11 = vector.broadcast %cst_7 : f32 to vector<16x64xf32>
    %12 = arith.mulf %8, %11 : vector<16x64xf32>
    %13 = math.erf %12 : vector<16x64xf32>
    %cst_8 = arith.constant 1.000000e+00 : f32
    %14 = vector.broadcast %cst_8 : f32 to vector<16x64xf32>
    %15 = arith.addf %14, %13 : vector<16x64xf32>
    %16 = arith.mulf %10, %15 : vector<16x64xf32>
    %c0_9 = arith.constant 0 : index
    %c0_10 = arith.constant 0 : index
    %17 = vector.load %arg11[%c0_9, %c0_10] : memref<16x32xf32, #tpu.memory_space<vmem>>, vector<16x32xf32>
    %c0_11 = arith.constant 0 : index
    %c0_12 = arith.constant 0 : index
    %18 = vector.load %arg7[%c0_11, %c0_12] : memref<64x32xf32, #tpu.memory_space<vmem>>, vector<64x32xf32>
    %cst_13 = arith.constant dense<0.000000e+00> : vector<16x32xf32>
    %19 = tpu.matmul %16, %18, %cst_13 {dimension_numbers = #tpu.dot_dimension_numbers<[1], [0], [0], [1], [0, 0, 1, 1], [], []>} : vector<16x64xf32>, vector<64x32xf32>, vector<16x32xf32> -> vector<16x32xf32>
    %20 = arith.addf %17, %19 : vector<16x32xf32>
    %c0_14 = arith.constant 0 : index
    %c0_15 = arith.constant 0 : index
    %21 = vector.load %arg11[%c0_14, %c0_15] : memref<16x32xf32, #tpu.memory_space<vmem>>, vector<16x32xf32>
    tpu.vector_store %arg11[%c0_14, %c0_15], %20 {strides = array<i32>} : memref<16x32xf32, #tpu.memory_space<vmem>>, vector<16x32xf32>,
    %c0_i32_16 = arith.constant 0 : i32
    %22 = arith.cmpi eq, %arg1, %c0_i32_16 : i32
    %23 = arith.extui %22 : i1 to i32
    %c0_i32_17 = arith.constant 0 : i32
    %24 = arith.cmpi ne, %23, %c0_i32_17 : i32
    scf.if %24 {
      %c0_18 = arith.constant 0 : index
      %c0_19 = arith.constant 0 : index
      %25 = vector.load %arg11[%c0_18, %c0_19] : memref<16x32xf32, #tpu.memory_space<vmem>>, vector<16x32xf32>
      %c0_20 = arith.constant 0 : index
      %c0_21 = arith.constant 0 : index
      %26 = vector.load %arg8[%c0_20, %c0_21] : memref<1x32xf32, #tpu.memory_space<vmem>>, vector<1x32xf32>
      %27 = vector.broadcast %26 : vector<1x32xf32> to vector<16x32xf32>
      %28 = arith.addf %25, %27 : vector<16x32xf32>
      %cst_22 = arith.constant 5.000000e-01 : f32
      %29 = vector.broadcast %cst_22 : f32 to vector<16x32xf32>
      %30 = arith.mulf %29, %28 : vector<16x32xf32>
      %cst_23 = arith.constant 0.707106769 : f32
      %31 = vector.broadcast %cst_23 : f32 to vector<16x32xf32>
      %32 = arith.mulf %28, %31 : vector<16x32xf32>
      %33 = math.erf %32 : vector<16x32xf32>
      %cst_24 = arith.constant 1.000000e+00 : f32
      %34 = vector.broadcast %cst_24 : f32 to vector<16x32xf32>
      %35 = arith.addf %34, %33 : vector<16x32xf32>
      %36 = arith.mulf %30, %35 : vector<16x32xf32>
      %c0_25 = arith.constant 0 : index
      %c0_26 = arith.constant 0 : index
      %37 = vector.load %arg9[%c0_25, %c0_26] : memref<16x32xf32, #tpu.memory_space<vmem>>, vector<16x32xf32>
      tpu.vector_store %arg9[%c0_25, %c0_26], %36 {strides = array<i32>} : memref<16x32xf32, #tpu.memory_space<vmem>>, vector<16x32xf32>,
    } else {
    }
    return
  }
  func.func @transform_0(%arg0: i32, %arg1: i32) -> (i32, i32) {
    %c0_i32 = arith.constant 0 : i32
    %c0_i32_0 = arith.constant 0 : i32
    return %arg0, %c0_i32 : i32, i32
  }
  func.func @transform_1(%arg0: i32, %arg1: i32) -> (i32, i32) {
    %c0_i32 = arith.constant 0 : i32
    %c0_i32_0 = arith.constant 0 : i32
    %c0_i32_1 = arith.constant 0 : i32
    return %c0_i32, %c0_i32_0 : i32, i32
  }
  func.func @transform_2(%arg0: i32, %arg1: i32) -> (i32, i32) {
    %c0_i32 = arith.constant 0 : i32
    %c0_i32_0 = arith.constant 0 : i32
    %c0_i32_1 = arith.constant 0 : i32
    return %c0_i32, %c0_i32_0 : i32, i32
  }
  func.func @transform_3(%arg0: i32, %arg1: i32) -> (i32, i32) {
    %c0_i32 = arith.constant 0 : i32
    %c0_i32_0 = arith.constant 0 : i32
    return %c0_i32, %arg1 : i32, i32
  }
  func.func @transform_4(%arg0: i32, %arg1: i32) -> (i32, i32) {
    %c0_i32 = arith.constant 0 : i32
    %c0_i32_0 = arith.constant 0 : i32
    return %c0_i32, %arg1 : i32, i32
  }
  func.func @transform_5(%arg0: i32, %arg1: i32) -> (i32, i32) {
    %c0_i32 = arith.constant 0 : i32
    %c0_i32_0 = arith.constant 0 : i32
    return %arg1, %c0_i32 : i32, i32
  }
  func.func @transform_6(%arg0: i32, %arg1: i32) -> (i32, i32) {
    %c0_i32 = arith.constant 0 : i32
    %c0_i32_0 = arith.constant 0 : i32
    %c0_i32_1 = arith.constant 0 : i32
    return %c0_i32, %c0_i32_0 : i32, i32
  }
  func.func @transform_7(%arg0: i32, %arg1: i32) -> (i32, i32) {
    %c0_i32 = arith.constant 0 : i32
    %c0_i32_0 = arith.constant 0 : i32
    return %arg0, %c0_i32 : i32, i32
  }
}

</mosaic_0001>

<llo_original>
// kernel: tpu_custom_call.1
$region0: #{tpu_custom_call.1}
  #allocation0 [shape = 'u32[]', space=smem, size = 0x4, offset = 0x4, fixed_abs, tag = 'smem constant byte address 0x4 - core index']
  #allocation1 [shape = 'u32[144,128]{1,0:T(1,128)}', space=vmem, size = 0x12000, scoped, tag = 'internal scratch']
  #allocation2 [shape = 'f32[16,32]{1,0:T(8,128)}', space=vmem, size = 0x2000, scoped, tag = 'scratch operand']
  #allocation3 [shape = 'f32[16,32]{1,0:T(8,128)}', space=vmem, size = 0x2000, scoped, tag = 'scratch operand']
  %s0 = inlined_call_operand.vmem [shape: f32[16,32], index: 0, kind: input, shape index: {}]
  %s1 = inlined_call_operand.vmem [shape: f32[1,32], index: 1, kind: input, shape index: {}]
  %s2 = inlined_call_operand.vmem [shape: f32[1,32], index: 2, kind: input, shape index: {}]
  %s3 = inlined_call_operand.vmem [shape: f32[32,64], index: 3, kind: input, shape index: {}]
  %s4 = inlined_call_operand.vmem [shape: f32[1,64], index: 4, kind: input, shape index: {}]
  %s5 = inlined_call_operand.vmem [shape: f32[64,32], index: 5, kind: input, shape index: {}]
  %s6 = inlined_call_operand.vmem [shape: f32[1,32], index: 6, kind: input, shape index: {}]
  %s7 = inlined_call_operand.hbm [shape: f32[16,32], index: 7, kind: output, shape index: {}]
  %s8 = sld [smem:[#allocation0]]
  $region46: #{tpu_custom_call.1} parent=0
    _
  %s10 = ssub.s32 1, %s8
  %s11 = scalar_select 0, %s10, %s8
  $region1: #{tpu_custom_call.1} parent=0
    #allocation4 [shape = 'u8[8192]{0}', space=vmem, size = 0x2000, scoped, tag = 'output window, operand 0, single buffered']
    #allocation5 [shape = 's32[1]{0}', space=sflag, size = 0x4, scoped, tag = 'scoped memory for tpu_custom_call.1']
    %12 = vsyncpa [#allocation5], 0
    // Predicated region
    $region2: #{tpu_custom_call.1} parent=1 // pred_check
      _
    $region3: #{tpu_custom_call.1} parent=1 // pred_check_branch
      %14 = sbr.rel (0) target = $region5
    $region4: #{tpu_custom_call.1} parent=1 // pred_region
      _
    $region5: #{tpu_custom_call.1} parent=1 // pred_fallthru
      _
    // Predicated region
    $region6: #{tpu_custom_call.1} parent=1 // pred_check
      _
    $region7: #{tpu_custom_call.1} parent=1 // pred_check_branch
      %16 = sbr.rel (0) target = $region9
    $region8: #{tpu_custom_call.1} parent=1 // pred_region
      _
    $region9: #{tpu_custom_call.1} parent=1 // pred_fallthru
      _
    // Predicated region
    $region10: #{tpu_custom_call.1} parent=1 // pred_check
      _
    $region11: #{tpu_custom_call.1} parent=1 // pred_check_branch
      %18 = sbr.rel (0) target = $region13
    $region12: #{tpu_custom_call.1} parent=1 // pred_region
      _
    $region13: #{tpu_custom_call.1} parent=1 // pred_fallthru
      _
    // Predicated region
    $region14: #{tpu_custom_call.1} parent=1 // pred_check
      _
    $region15: #{tpu_custom_call.1} parent=1 // pred_check_branch
      %20 = sbr.rel (0) target = $region17
    $region16: #{tpu_custom_call.1} parent=1 // pred_region
      _
    $region17: #{tpu_custom_call.1} parent=1 // pred_fallthru
      _
    // Predicated region
    $region18: #{tpu_custom_call.1} parent=1 // pred_check
      _
    $region19: #{tpu_custom_call.1} parent=1 // pred_check_branch
      %22 = sbr.rel (0) target = $region21
    $region20: #{tpu_custom_call.1} parent=1 // pred_region
      _
    $region21: #{tpu_custom_call.1} parent=1 // pred_fallthru
      _
    // Predicated region
    $region22: #{tpu_custom_call.1} parent=1 // pred_check
      _
    $region23: #{tpu_custom_call.1} parent=1 // pred_check_branch
      %24 = sbr.rel (0) target = $region25
    $region24: #{tpu_custom_call.1} parent=1 // pred_region
      _
    $region25: #{tpu_custom_call.1} parent=1 // pred_fallthru
      _
    // Predicated region
    $region26: #{tpu_custom_call.1} parent=1 // pred_check
      _
    $region27: #{tpu_custom_call.1} parent=1 // pred_check_branch
      %26 = sbr.rel (0) target = $region29
    $region28: #{tpu_custom_call.1} parent=1 // pred_region
      _
    $region29: #{tpu_custom_call.1} parent=1 // pred_fallthru
      _
    %p27 = scmp.eq.s32.totalorder 0, 0
    // Predicated region
    $region30: #{tpu_custom_call.1} parent=1 // pred_check
      %p28 = pneg %p27
    $region31: #{tpu_custom_call.1} parent=1 // pred_check_branch
      %30 = sbr.rel (%p28) target = $region33
    $region32: #{tpu_custom_call.1} parent=1 // pred_region
      %v31 = vld [vmem:[%s0] sm:$0xff]
      %v32 = vld [vmem:[%s0 + $0x8] sm:$0xff]
      %vm33 = vcmask 261120
      %v34 = vsel %vm33, %v31, 0.0
      %35 = vadd.xlane.f32.xlu0 %v34
      %v36 = vpop.xlane.xlu0 %35
      %v37 = vsel %vm33, %v32, 0.0
      %38 = vadd.xlane.f32.xlu0 %v37
      %v39 = vpop.xlane.xlu0 %38
      %v40 = vrcp.pop 32.0
      %v41 = vmul.f32 %v36, %v40
      %v42 = vmul.f32 %v39, %v40
      %v43 = vsub.f32 %v31, %v41
      %v44 = vsub.f32 %v32, %v42
      %v45 = vmul.f32 %v43, %v43
      %v46 = vmul.f32 %v44, %v44
      %v47 = vsel %vm33, %v45, 0.0
      %48 = vadd.xlane.f32.xlu0 %v47
      %v49 = vpop.xlane.xlu0 %48
      %v50 = vsel %vm33, %v46, 0.0
      %51 = vadd.xlane.f32.xlu0 %v50
      %v52 = vpop.xlane.xlu0 %51
      %v53 = vmul.f32 %v49, %v40
      %v54 = vmul.f32 %v52, %v40
      %v55 = vadd.f32 %v53, 1e-05
      %v56 = vadd.f32 %v54, 1e-05
      %v57 = vrsqrt.pop %v55
      %v58 = vrsqrt.pop %v56
      %v59 = vmul.f32 %v43, %v57
      %v60 = vmul.f32 %v44, %v58
      %v61 = vld [vmem:[%s1] sm:$0x1]
      %v63 = vlaneseq
      %v64 = vshrl.u32 %v63, 7
      %v65 = vsub.s32 0, %v64
      %v66 = vrot.slane %v61, %v65
      %v68 = vmul.f32 %v59, %v66
      %v69 = vmul.f32 %v60, %v66
      %v70 = vld [vmem:[%s2] sm:$0x1]
      %v72 = vlaneseq
      %v73 = vshrl.u32 %v72, 7
      %v74 = vsub.s32 0, %v73
      %v75 = vrot.slane %v70, %v74
      %v77 = vadd.f32 %v68, %v75
      %v78 = vadd.f32 %v69, %v75
      %79 = vst.msk [vmem:[#allocation2] sm:$0xff] %vm33, %v77
      %80 = vst.msk [vmem:[#allocation2 + $0x8] sm:$0xff] %vm33, %v78
      %81 = vst.msk [vmem:[#allocation3] sm:$0xff] %vm33, 0.0
      %82 = vst.msk [vmem:[#allocation3 + $0x8] sm:$0xff] %vm33, 0.0
    $region33: #{tpu_custom_call.1} parent=1 // pred_fallthru
      _
    %v83 = vld [vmem:[#allocation2] sm:$0xff]
    %v84 = vld [vmem:[#allocation2 + $0x8] sm:$0xff]
    %v85 = vld [vmem:[%s3] sm:$0xff]
    %v86 = vld [vmem:[%s3 + $0x8] sm:$0xff]
    %v87 = vld [vmem:[%s3 + $0x10] sm:$0xff]
    %v88 = vld [vmem:[%s3 + $0x18] sm:$0xff]
    %v89 = vld [vmem:[%s4] sm:$0x1]
    %v91 = vlaneseq
    %v92 = vshrl.u32 %v91, 7
    %v93 = vsub.s32 0, %v92
    %v94 = vrot.slane %v89, %v93
    %vm96 = vcmask 261120
    %v98 = vsel %vm96, %v83, 0
    %v101 = vsel %vm96, %v84, 0
    %103 = vmatprep.subr.mxu0 0.0
    %104 = vmatpush1.msra.mxu0 %v85
    %105 = vmatprep.subr.mxu0 0.0
    %106 = vmatpush1.msra.mxu0 %v86
    %107 = vmatprep.subr.mxu0 0.0
    %108 = vmatpush1.msra.mxu0 %v87
    %109 = vmatprep.subr.mxu0 0.0
    %110 = vmatpush1.msra.mxu0 %v88
    %111 = vmatprep.subr.mxu0 0.0
    %112 = vmatpush1.msra.mxu0 0.0
    %113 = vmatprep.subr.mxu0 0.0
    %114 = vmatpush1.msra.mxu0 0.0
    %115 = vmatprep.subr.mxu0 0.0
    %116 = vmatpush1.msra.mxu0 0.0
    %117 = vmatprep.subr.mxu0 0.0
    %118 = vmatpush1.msra.mxu0 0.0
    %119 = vmatprep.subr.mxu0 0.0
    %120 = vmatpush1.msra.mxu0 0.0
    %121 = vmatprep.subr.mxu0 0.0
    %122 = vmatpush1.msra.mxu0 0.0
    %123 = vmatprep.subr.mxu0 0.0
    %124 = vmatpush1.msra.mxu0 0.0
    %125 = vmatprep.subr.mxu0 0.0
    %126 = vmatpush1.msra.mxu0 0.0
    %127 = vmatprep.subr.mxu0 0.0
    %128 = vmatpush1.msra.mxu0 0.0
    %129 = vmatprep.subr.mxu0 0.0
    %130 = vmatpush1.msra.mxu0 0.0
    %131 = vmatprep.subr.mxu0 0.0
    %132 = vmatpush1.msra.mxu0 0.0
    %133 = vmatprep.subr.mxu0 0.0
    %134 = vmatpush1.msra.mxu0 0.0
    %135 = vmatprep.subr.mxu0 0.0
    %136 = vmatpush1.msra.mxu0 0.0
    %137 = vmatprep.subr.mxu0 0.0
    %138 = vmatpush1.msra.mxu0 0.0
    %139 = vmatprep.subr.mxu0 0.0
    %140 = vmatpush1.msra.mxu0 0.0
    %141 = vmatprep.subr.mxu0 0.0
    %142 = vmatpush1.msra.mxu0 0.0
    %143 = vmatprep.subr.mxu0 0.0
    %144 = vmatpush1.msra.mxu0 0.0
    %145 = vmatprep.subr.mxu0 0.0
    %146 = vmatpush1.msra.mxu0 0.0
    %147 = vmatprep.subr.mxu0 0.0
    %148 = vmatpush1.msra.mxu0 0.0
    %149 = vmatprep.subr.mxu0 0.0
    %150 = vmatpush1.msra.mxu0 0.0
    %151 = vmatprep.subr.mxu0 0.0
    %152 = vmatpush1.msra.mxu0 0.0
    %153 = vmatprep.subr.mxu0 0.0
    %154 = vmatpush1.msra.mxu0 0.0
    %155 = vmatprep.subr.mxu0 0.0
    %156 = vmatpush1.msra.mxu0 0.0
    %157 = vmatprep.subr.mxu0 0.0
    %158 = vmatpush1.msra.mxu0 0.0
    %159 = vmatprep.subr.mxu0 0.0
    %160 = vmatpush1.msra.mxu0 0.0
    %161 = vmatprep.subr.mxu0 0.0
    %162 = vmatpush1.msra.mxu0 0.0
    %163 = vmatprep.subr.mxu0 0.0
    %164 = vmatpush1.msra.mxu0 0.0
    %165 = vmatprep.subr.mxu0 0.0
    %166 = vmatpush1.msra.mxu0 0.0
    %167 = vmatprep.mubr.f32.mxu0 0.0
    %168 = vmatmul.mubr.f32.gmra.mrb[0].mxu0 %v98
    %v169 = vpop.f32.mrb[0].mxu0
    %v170 = vadd.f32 %v94, %v169
    %v171 = vpop.f32.mrb[0].mxu0
    %172 = vmatprep.mubr.f32.mxu0 0.0
    %173 = vmatmul.mubr.f32.gmra.mrb[0].mxu0 %v101
    %v174 = vpop.f32.mrb[0].mxu0
    %v175 = vadd.f32 %v94, %v174
    %v176 = vpop.f32.mrb[0].mxu0
    %177 = vdwg.mxu0
    %v178 = vmul.f32 %v170, 0.5
    %v179 = vmul.f32 %v175, 0.5
    %v180 = vmul.f32 %v170, 0.70710677
    %v181 = vmul.f32 %v175, 0.70710677
    %v182 = verf.f32.pop %v180
    %v183 = verf.f32.pop %v181
    %v184 = vadd.f32 %v182, 1.0
    %v185 = vadd.f32 %v183, 1.0
    %v186 = vmul.f32 %v178, %v184
    %v187 = vmul.f32 %v179, %v185
    %v188 = vld [vmem:[#allocation3] sm:$0xff]
    %v189 = vld [vmem:[#allocation3 + $0x8] sm:$0xff]
    %v190 = vld [vmem:[%s5] sm:$0xff]
    %v191 = vld [vmem:[%s5 + $0x8] sm:$0xff]
    %v192 = vld [vmem:[%s5 + $0x10] sm:$0xff]
    %v193 = vld [vmem:[%s5 + $0x18] sm:$0xff]
    %v194 = vld [vmem:[%s5 + $0x20] sm:$0xff]
    %v195 = vld [vmem:[%s5 + $0x28] sm:$0xff]
    %v196 = vld [vmem:[%s5 + $0x30] sm:$0xff]
    %v197 = vld [vmem:[%s5 + $0x38] sm:$0xff]
    %vm198 = vcmask 523264
    %v200 = vsel %vm198, %v186, 0
    %v203 = vsel %vm198, %v187, 0
    %205 = vmatprep.subr.mxu0 0.0
    %206 = vmatpush1.msra.mxu0 %v190
    %207 = vmatprep.subr.mxu0 0.0
    %208 = vmatpush1.msra.mxu0 %v191
    %209 = vmatprep.subr.mxu0 0.0
    %210 = vmatpush1.msra.mxu0 %v192
    %211 = vmatprep.subr.mxu0 0.0
    %212 = vmatpush1.msra.mxu0 %v193
    %213 = vmatprep.subr.mxu0 0.0
    %214 = vmatpush1.msra.mxu0 %v194
    %215 = vmatprep.subr.mxu0 0.0
    %216 = vmatpush1.msra.mxu0 %v195
    %217 = vmatprep.subr.mxu0 0.0
    %218 = vmatpush1.msra.mxu0 %v196
    %219 = vmatprep.subr.mxu0 0.0
    %220 = vmatpush1.msra.mxu0 %v197
    %221 = vmatprep.subr.mxu0 0.0
    %222 = vmatpush1.msra.mxu0 0.0
    %223 = vmatprep.subr.mxu0 0.0
    %224 = vmatpush1.msra.mxu0 0.0
    %225 = vmatprep.subr.mxu0 0.0
    %226 = vmatpush1.msra.mxu0 0.0
    %227 = vmatprep.subr.mxu0 0.0
    %228 = vmatpush1.msra.mxu0 0.0
    %229 = vmatprep.subr.mxu0 0.0
    %230 = vmatpush1.msra.mxu0 0.0
    %231 = vmatprep.subr.mxu0 0.0
    %232 = vmatpush1.msra.mxu0 0.0
    %233 = vmatprep.subr.mxu0 0.0
    %234 = vmatpush1.msra.mxu0 0.0
    %235 = vmatprep.subr.mxu0 0.0
    %236 = vmatpush1.msra.mxu0 0.0
    %237 = vmatprep.subr.mxu0 0.0
    %238 = vmatpush1.msra.mxu0 0.0
    %239 = vmatprep.subr.mxu0 0.0
    %240 = vmatpush1.msra.mxu0 0.0
    %241 = vmatprep.subr.mxu0 0.0
    %242 = vmatpush1.msra.mxu0 0.0
    %243 = vmatprep.subr.mxu0 0.0
    %244 = vmatpush1.msra.mxu0 0.0
    %245 = vmatprep.subr.mxu0 0.0
    %246 = vmatpush1.msra.mxu0 0.0
    %247 = vmatprep.subr.mxu0 0.0
    %248 = vmatpush1.msra.mxu0 0.0
    %249 = vmatprep.subr.mxu0 0.0
    %250 = vmatpush1.msra.mxu0 0.0
    %251 = vmatprep.subr.mxu0 0.0
    %252 = vmatpush1.msra.mxu0 0.0
    %253 = vmatprep.subr.mxu0 0.0
    %254 = vmatpush1.msra.mxu0 0.0
    %255 = vmatprep.subr.mxu0 0.0
    %256 = vmatpush1.msra.mxu0 0.0
    %257 = vmatprep.subr.mxu0 0.0
    %258 = vmatpush1.msra.mxu0 0.0
    %259 = vmatprep.subr.mxu0 0.0
    %260 = vmatpush1.msra.mxu0 0.0
    %261 = vmatprep.subr.mxu0 0.0
    %262 = vmatpush1.msra.mxu0 0.0
    %263 = vmatprep.subr.mxu0 0.0
    %264 = vmatpush1.msra.mxu0 0.0
    %265 = vmatprep.subr.mxu0 0.0
    %266 = vmatpush1.msra.mxu0 0.0
    %267 = vmatprep.subr.mxu0 0.0
    %268 = vmatpush1.msra.mxu0 0.0
    %269 = vmatprep.mubr.f32.mxu0 0.0
    %270 = vmatmul.mubr.f32.gmra.mrb[0].mxu0 %v200
    %v271 = vpop.f32.mrb[0].mxu0
    %v272 = vadd.f32 0.0, %v271
    %v273 = vpop.f32.mrb[0].mxu0
    %274 = vmatprep.mubr.f32.mxu0 0.0
    %275 = vmatmul.mubr.f32.gmra.mrb[0].mxu0 %v203
    %v276 = vpop.f32.mrb[0].mxu0
    %v277 = vadd.f32 0.0, %v276
    %v278 = vpop.f32.mrb[0].mxu0
    %279 = vdwg.mxu0
    %v280 = vadd.f32 %v188, %v272
    %v281 = vadd.f32 %v189, %v277
    %282 = vst.msk [vmem:[#allocation3] sm:$0xff] %vm96, %v280
    %283 = vst.msk [vmem:[#allocation3 + $0x8] sm:$0xff] %vm96, %v281
    // Predicated region
    $region34: #{tpu_custom_call.1} parent=1 // pred_check
      %p284 = pneg %p27
    $region35: #{tpu_custom_call.1} parent=1 // pred_check_branch
      %286 = sbr.rel (%p284) target = $region37
    $region36: #{tpu_custom_call.1} parent=1 // pred_region
      %v287 = vld [vmem:[#allocation3] sm:$0xff]
      %v288 = vld [vmem:[#allocation3 + $0x8] sm:$0xff]
      %v289 = vld [vmem:[%s6] sm:$0x1]
      %v291 = vlaneseq
      %v292 = vshrl.u32 %v291, 7
      %v293 = vsub.s32 0, %v292
      %v294 = vrot.slane %v289, %v293
      %v296 = vadd.f32 %v287, %v294
      %v297 = vadd.f32 %v288, %v294
      %v298 = vmul.f32 %v296, 0.5
      %v299 = vmul.f32 %v297, 0.5
      %v300 = vmul.f32 %v296, 0.70710677
      %v301 = vmul.f32 %v297, 0.70710677
      %v302 = verf.f32.pop %v300
      %v303 = verf.f32.pop %v301
      %v304 = vadd.f32 %v302, 1.0
      %v305 = vadd.f32 %v303, 1.0
      %v306 = vmul.f32 %v298, %v304
      %v307 = vmul.f32 %v299, %v305
      %308 = vst.msk [vmem:[#allocation4] sm:$0xff] %vm96, %v306
      %309 = vst.msk [vmem:[#allocation4 + $0x8] sm:$0xff] %vm96, %v307
    $region37: #{tpu_custom_call.1} parent=1 // pred_fallthru
      _
    // Predicated region
    $region38: #{tpu_custom_call.1} parent=1 // pred_check
      _
    $region39: #{tpu_custom_call.1} parent=1 // pred_check_branch
      %311 = sbr.rel (0) target = $region41
    $region40: #{tpu_custom_call.1} parent=1 // pred_region
      %s313 = ssub.s32 256, 256
      %314 = vsyncadd [#allocation5], %s313
      %s315 = sshll.u32 [#allocation4], 4
      %s316 = int_to_ptr.vmem [resolvable:$true] %s315
      %321 = dma.vmem_to_hbm [thread:$0]  %s316, 256, %s7, [#allocation5], 128, 128, 8
    $region41: #{tpu_custom_call.1} parent=1 // pred_fallthru
      _
    // Predicated region
    $region42: #{tpu_custom_call.1} parent=1 // pred_check
      _
    $region43: #{tpu_custom_call.1} parent=1 // pred_check_branch
      %323 = sbr.rel (0) target = $region45
    $region44: #{tpu_custom_call.1} parent=1 // pred_region
      %324 = dma.done [#allocation5], 256
    $region45: #{tpu_custom_call.1} parent=1 // pred_fallthru
      _
    %325 = vsyncpa [#allocation5], 1

</llo_original>
